<compile_context>
chip_gen: v6e
topology: v6e:2x2x1
jax: 0.10.0
libtpu: 0.0.40
codegen_flags: <defaults>
</compile_context>

<pallas_src>
import functools

import jax
import jax.numpy as jnp
from jax.experimental import pallas as pl
from jax.experimental.pallas import tpu as pltpu


def _norm_kernel(x_ref, gamma_ref, beta_ref, o_ref, *, inv_count, eps):
    """Fused stats + normalize + affine for one (nb, gb, M) block.

    x_ref:     (nb, gb, M)        input block (M on lanes, gb on sublanes)
    gamma_ref: (1, gb, M or 1)    per-row (and optionally per-lane) scale
    beta_ref:  (1, gb, M or 1)    per-row shift
    o_ref:     (nb, gb, M)        output block

    Statistics are computed per (n, g) row over the lane axis only, so blocking the
    leading (batch) and sublane (group) axes never crosses a reduction.
    """
    x = x_ref[...].astype(jnp.float32)

    s1 = jnp.sum(x, axis=-1, keepdims=True)
    s2 = jnp.sum(x * x, axis=-1, keepdims=True)

    mean = s1 * inv_count
    # Biased variance (matches torch); clamp guards E[x^2]-mean^2 cancellation -> NaN.
    var = jnp.maximum(s2 * inv_count - mean * mean, 0.0)
    inv = jax.lax.rsqrt(var + eps)                      # EUP, effectively free

    # Fold the affine into the normalize: y = x*scale + shift.
    scale = inv * gamma_ref[...]
    shift = beta_ref[...] - mean * scale
    o_ref[...] = (x * scale + shift).astype(o_ref.dtype)


@functools.lru_cache(maxsize=1)
def _tpu_budget():
    """(vmem_limit_bytes, tile_target_bytes, multi_tc) derived from the local chip."""
    vmem_cap = 64 << 20          # conservative default (v7x per-TC VMEM)
    get_info = getattr(pltpu, "get_tpu_info", None)
    if get_info is not None:
        try:
            cap = getattr(get_info(), "vmem_capacity_bytes", None)
            if cap:
                vmem_cap = int(cap)
        except Exception:
            pass
    try:
        kind = jax.devices()[0].device_kind.lower()
    except Exception:
        kind = ""
    # Chips with >1 TensorCore per device (megacore): shard the parallel grid axes.
    multi_tc = ("v7" in kind) or ("7x" in kind) or ("v4" in kind) or ("v5p" in kind)

    # Leave headroom: 3/4 of physical VMEM, capped at 96 MiB.
    vmem_limit = min(vmem_cap * 3 // 4, 96 << 20)
    # Live bytes per tile ~ 2x in + 2x out (double buffering) + ~4 f32 temps
    # (x.astype(f32), scale, shift, product) => budget ~1/8 of the limit per tile.
    tile_target = max(vmem_limit // 8, 1 << 20)
    return vmem_limit, tile_target, multi_tc


def _pick_tiles(N, G, M, itemsize):
    """Choose (nb, gb, grid) for blocks of shape (nb, gb, M)."""
    vmem_limit, tile_target, multi_tc = _tpu_budget()

    per_row_bytes = M * itemsize          # one (n, g) row
    per_batch_bytes = G * per_row_bytes   # one batch element

    if per_batch_bytes <= tile_target:
        gb = G
        nb = max(1, min(N, tile_target // per_batch_bytes))
    else:
        # One batch element does not fit the tile budget: block the group axis too.
        nb = 1
        rows_fit = max(1, tile_target // max(per_row_bytes, 1))
        if rows_fit >= G or G <= 8:
            gb = G
        else:
            # Partial sublane blocks must be a multiple of 8 (or equal the full dim).
            gb = min(G, max(8, (rows_fit // 8) * 8))
        # TODO(synk): if a single (1, 1, M) row exceeds VMEM, a blocked reduction over
        # M (cross-block running stats) would be needed; not implemented.

    if multi_tc and N > 1:
        # Keep >= 2 grid steps so both TensorCores get work; prefer an even grid.
        nb = min(nb, pl.cdiv(N, 2))
        for cand in range(nb, max(0, nb - 4), -1):
            if (pl.cdiv(N, cand) * pl.cdiv(G, gb)) % 2 == 0:
                nb = cand
                break

    grid = (pl.cdiv(N, nb), pl.cdiv(G, gb))
    return nb, gb, grid, vmem_limit


def _pallas_group_norm(x, gamma, beta, *, num_groups, eps):
    """x: (N, C, L); gamma, beta: (C,). GroupNorm (IN == num_groups=C)."""
    N, C, L = x.shape
    if C % num_groups != 0:
        raise ValueError("num_features must be divisible by num_groups")
    G = num_groups
    cpg = C // G
    M = cpg * L                                   # per-group reduced extent (lanes)
    itemsize = jnp.dtype(x.dtype).itemsize

    nb, gb, grid, vmem_limit = _pick_tiles(N, G, M, itemsize)

    if cpg == 1:
        # InstanceNorm: params broadcast along lanes inside the kernel (tiny block).
        xv = x
        gamma_b = gamma.reshape(1, C, 1).astype(jnp.float32)
        beta_b = beta.reshape(1, C, 1).astype(jnp.float32)
        p_last = 1
    else:
        # Contiguous, layout-preserving view: lane-dense reduced axis of size cpg*L.
        xv = x.reshape(N, G, M)
        # nb-independent pre-broadcast params; gamma_b[0, g, c*L + l] = gamma[g*cpg+c].
        gamma_b = jnp.broadcast_to(
            gamma.reshape(G, cpg, 1).astype(jnp.float32), (G, cpg, L)).reshape(1, G, M)
        beta_b = jnp.broadcast_to(
            beta.reshape(G, cpg, 1).astype(jnp.float32), (G, cpg, L)).reshape(1, G, M)
        p_last = M

    kernel = functools.partial(_norm_kernel, inv_count=1.0 / M, eps=eps)

    # NOTE: nb need not divide N (nor gb divide G).  Padded rows in partial trailing
    # blocks compute garbage statistics but are never written back; the reduction
    # axis (lanes) never crosses the blocked axes, so valid rows are unaffected.
    out = pl.pallas_call(
        kernel,
        out_shape=jax.ShapeDtypeStruct((N, G, M), x.dtype),
        grid=grid,
        in_specs=[
            pl.BlockSpec((nb, gb, M), lambda n, g: (n, g, 0)),
            pl.BlockSpec((1, gb, p_last), lambda n, g: (0, g, 0)),
            pl.BlockSpec((1, gb, p_last), lambda n, g: (0, g, 0)),
        ],
        out_specs=pl.BlockSpec((nb, gb, M), lambda n, g: (n, g, 0)),
        compiler_params=pltpu.CompilerParams(
            dimension_semantics=("parallel", "parallel"),
            vmem_limit_bytes=vmem_limit,
        ),
    )(xv, gamma_b, beta_b)
    return out.reshape(N, C, L)


@functools.partial(jax.jit, static_argnames=("num_groups", "eps"))
def _norm_selection_fwd(x, gamma, beta, *, num_groups, eps):
    return _pallas_group_norm(x, gamma, beta, num_groups=num_groups, eps=eps)


class NormSelection:
    """JAX/Pallas port of the PyTorch NormSelection dispatcher.

    Supported norm_type values: 'GN', 'IN', 'None'.
    # TODO(synk): 'BN'/'CN'/'Scale'/'BGN' and the ItN/DBN/PCA/QR/EIG whitening branches
    # reference classes not present in the given source (or require cross-batch
    # running statistics); not translated.
    # TODO(synk): InstanceNorm eval-mode running statistics (momentum tracking) are not
    # modeled; instance (training-mode) statistics are used.
    """

    def __init__(self, norm_type, num_features, num_groups=4, eps=1e-5, affine=True,
                 **kwargs):
        if norm_type not in ("GN", "IN", "None"):
            raise ValueError(f"Unsupported normalization type '{norm_type}'")
        self.norm_type = norm_type
        self.num_features = num_features
        self.num_groups = num_groups
        self.eps = float(eps)
        self.affine = affine
        # torch GroupNorm / InstanceNorm affine defaults: weight=1, bias=0.
        # (affine=False is equivalent to this identity affine.)
        self.gamma = jnp.ones((num_features,), jnp.float32)
        self.beta = jnp.zeros((num_features,), jnp.float32)

    def __call__(self, x):
        if self.norm_type == "None":
            return x  # identity: no Pallas call, no extra HBM traffic
        groups = self.num_groups if self.norm_type == "GN" else self.num_features
        # 'IN': InstanceNorm1d (instance statistics) == GroupNorm with one group/channel.
        return _norm_selection_fwd(x, self.gamma, self.beta,
                                   num_groups=groups, eps=self.eps)


def _reference_group_norm(x, gamma, beta, num_groups, eps):
    N, C, L = x.shape
    xg = x.reshape(N, num_groups, (C // num_groups) * L).astype(jnp.float32)
    mean = xg.mean(axis=-1, keepdims=True)
    var = ((xg - mean) ** 2).mean(axis=-1, keepdims=True)
    xn = ((xg - mean) / jnp.sqrt(var + eps)).reshape(N, C, L)
    return xn * gamma.reshape(1, C, 1) + beta.reshape(1, C, 1)


if __name__ == "__main__":
    key = jax.random.PRNGKey(0)
    N, C, L = 4, 16, 128
    num_groups = 4
    kx, kg, kb = jax.random.split(key, 3)
    x = jax.random.normal(kx, (N, C, L), dtype=jnp.float32)
    gamma = 1.0 + 0.1 * jax.random.normal(kg, (C,), dtype=jnp.float32)
    beta = 0.1 * jax.random.normal(kb, (C,), dtype=jnp.float32)

    # GroupNorm branch
    gn = NormSelection("GN", num_features=C, num_groups=num_groups, eps=1e-5)
    gn.gamma, gn.beta = gamma, beta
    out_gn = jax.block_until_ready(gn(x))
    ref_gn = _reference_group_norm(x, gamma, beta, num_groups, 1e-5)
    assert out_gn.shape == x.shape and out_gn.dtype == x.dtype
    assert jnp.allclose(out_gn, ref_gn, atol=1e-4, rtol=1e-4)

    # InstanceNorm branch
    inorm = NormSelection("IN", num_features=C, eps=1e-5)
    inorm.gamma, inorm.beta = gamma, beta
    out_in = jax.block_until_ready(inorm(x))
    ref_in = _reference_group_norm(x, gamma, beta, C, 1e-5)
    assert jnp.allclose(out_in, ref_in, atol=1e-4, rtol=1e-4)

    # Identity branch
    ident = NormSelection("None", num_features=C)
    out_id = jax.block_until_ready(ident(x))
    assert jnp.array_equal(out_id, x)

    print("KERNEL_OK")
</pallas_src>

<mosaic_0001>
module attributes {stable_mosaic.version = 11 : i64} {
  func.func @_norm_kernel(%arg0: i32, %arg1: i32, %arg2: memref<4x4x512xf32, #tpu.memory_space<vmem>>, %arg3: memref<1x4x512xf32, #tpu.memory_space<vmem>>, %arg4: memref<1x4x512xf32, #tpu.memory_space<vmem>>, %arg5: memref<4x4x512xf32, #tpu.memory_space<vmem>>) attributes {dimension_semantics = [#tpu.dimension_semantics<parallel>, #tpu.dimension_semantics<parallel>], iteration_bounds = array<i64: 1, 1>, scalar_prefetch = 0 : i64, scratch_operands = 0 : i64, tpu.core_type = #tpu.core_type<tc>, window_params = [{transform_indices = @transform_0, window_bounds = array<i64: 4, 4, 512>}, {transform_indices = @transform_1, window_bounds = array<i64: 1, 4, 512>}, {transform_indices = @transform_2, window_bounds = array<i64: 1, 4, 512>}, {transform_indices = @transform_3, window_bounds = array<i64: 4, 4, 512>}]} {
    %c0 = arith.constant 0 : index
    %c0_0 = arith.constant 0 : index
    %c0_1 = arith.constant 0 : index
    %0 = vector.load %arg2[%c0, %c0_0, %c0_1] : memref<4x4x512xf32, #tpu.memory_space<vmem>>, vector<4x4x512xf32>
    %cst = arith.constant dense<0.000000e+00> : vector<4x4xf32>
    %1 = vector.multi_reduction <add>, %0, %cst [2] : vector<4x4x512xf32> to vector<4x4xf32>
    %2 = vector.shape_cast %1 : vector<4x4xf32> to vector<4x4x1xf32>
    %3 = arith.mulf %0, %0 : vector<4x4x512xf32>
    %cst_2 = arith.constant dense<0.000000e+00> : vector<4x4xf32>
    %4 = vector.multi_reduction <add>, %3, %cst_2 [2] : vector<4x4x512xf32> to vector<4x4xf32>
    %5 = vector.shape_cast %4 : vector<4x4xf32> to vector<4x4x1xf32>
    %cst_3 = arith.constant 0.001953125 : f32
    %6 = vector.broadcast %cst_3 : f32 to vector<4x4x1xf32>
    %7 = arith.mulf %2, %6 : vector<4x4x1xf32>
    %cst_4 = arith.constant 0.001953125 : f32
    %8 = vector.broadcast %cst_4 : f32 to vector<4x4x1xf32>
    %9 = arith.mulf %5, %8 : vector<4x4x1xf32>
    %10 = arith.mulf %7, %7 : vector<4x4x1xf32>
    %11 = arith.subf %9, %10 : vector<4x4x1xf32>
    %cst_5 = arith.constant 0.000000e+00 : f32
    %12 = vector.broadcast %cst_5 : f32 to vector<4x4x1xf32>
    %13 = arith.maximumf %11, %12 : vector<4x4x1xf32>
    %cst_6 = arith.constant 9.99999974E-6 : f32
    %14 = vector.broadcast %cst_6 : f32 to vector<4x4x1xf32>
    %15 = arith.addf %13, %14 : vector<4x4x1xf32>
    %16 = math.rsqrt %15 : vector<4x4x1xf32>
    %c0_7 = arith.constant 0 : index
    %c0_8 = arith.constant 0 : index
    %c0_9 = arith.constant 0 : index
    %17 = vector.load %arg3[%c0_7, %c0_8, %c0_9] : memref<1x4x512xf32, #tpu.memory_space<vmem>>, vector<1x4x512xf32>
    %18 = vector.broadcast %16 : vector<4x4x1xf32> to vector<4x4x512xf32>
    %19 = vector.broadcast %17 : vector<1x4x512xf32> to vector<4x4x512xf32>
    %20 = arith.mulf %18, %19 : vector<4x4x512xf32>
    %c0_10 = arith.constant 0 : index
    %c0_11 = arith.constant 0 : index
    %c0_12 = arith.constant 0 : index
    %21 = vector.load %arg4[%c0_10, %c0_11, %c0_12] : memref<1x4x512xf32, #tpu.memory_space<vmem>>, vector<1x4x512xf32>
    %22 = vector.broadcast %7 : vector<4x4x1xf32> to vector<4x4x512xf32>
    %23 = arith.mulf %22, %20 : vector<4x4x512xf32>
    %24 = vector.broadcast %21 : vector<1x4x512xf32> to vector<4x4x512xf32>
    %25 = arith.subf %24, %23 : vector<4x4x512xf32>
    %26 = arith.mulf %0, %20 : vector<4x4x512xf32>
    %27 = arith.addf %26, %25 : vector<4x4x512xf32>
    %c0_13 = arith.constant 0 : index
    %c0_14 = arith.constant 0 : index
    %c0_15 = arith.constant 0 : index
    %28 = vector.load %arg5[%c0_13, %c0_14, %c0_15] : memref<4x4x512xf32, #tpu.memory_space<vmem>>, vector<4x4x512xf32>
    tpu.vector_store %arg5[%c0_13, %c0_14, %c0_15], %27 {strides = array<i32>} : memref<4x4x512xf32, #tpu.memory_space<vmem>>, vector<4x4x512xf32>,
    return
  }
  func.func @transform_0(%arg0: i32, %arg1: i32) -> (i32, i32, i32) {
    %c0_i32 = arith.constant 0 : i32
    %c0_i32_0 = arith.constant 0 : i32
    return %arg0, %arg1, %c0_i32 : i32, i32, i32
  }
  func.func @transform_1(%arg0: i32, %arg1: i32) -> (i32, i32, i32) {
    %c0_i32 = arith.constant 0 : i32
    %c0_i32_0 = arith.constant 0 : i32
    %c0_i32_1 = arith.constant 0 : i32
    return %c0_i32, %arg1, %c0_i32_0 : i32, i32, i32
  }
  func.func @transform_2(%arg0: i32, %arg1: i32) -> (i32, i32, i32) {
    %c0_i32 = arith.constant 0 : i32
    %c0_i32_0 = arith.constant 0 : i32
    %c0_i32_1 = arith.constant 0 : i32
    return %c0_i32, %arg1, %c0_i32_0 : i32, i32, i32
  }
  func.func @transform_3(%arg0: i32, %arg1: i32) -> (i32, i32, i32) {
    %c0_i32 = arith.constant 0 : i32
    %c0_i32_0 = arith.constant 0 : i32
    return %arg0, %arg1, %c0_i32 : i32, i32, i32
  }
}

</mosaic_0001>

<llo_original>
// kernel: _norm_selection_fwd.1
$region0: #{_norm_selection_fwd.1}
  #allocation0 [shape = 'u32[]', space=smem, size = 0x4, offset = 0x4, fixed_abs, tag = 'smem constant byte address 0x4 - core index']
  #allocation1 [shape = 'u32[144,128]{1,0:T(1,128)}', space=vmem, size = 0x12000, scoped, tag = 'internal scratch']
  %s0 = inlined_call_operand.vmem [shape: f32[4,4,512], index: 0, kind: input, shape index: {}]
  %s1 = inlined_call_operand.vmem [shape: f32[1,4,512], index: 1, kind: input, shape index: {}]
  %s2 = inlined_call_operand.vmem [shape: f32[1,4,512], index: 2, kind: input, shape index: {}]
  %s3 = inlined_call_operand.vmem [shape: f32[4,4,512], index: 3, kind: output, shape index: {}]
  %s4 = sld [smem:[#allocation0]]
  $region22: #{_norm_selection_fwd.1} parent=0
    _
  %s6 = ssub.s32 1, %s4
  %s7 = scalar_select 0, %s6, %s4
  // Predicated region
  $region2: #{_norm_selection_fwd.1} parent=0 // pred_check
    _
  $region3: #{_norm_selection_fwd.1} parent=0 // pred_check_branch
    %9 = sbr.rel (0) target = $region5
  $region4: #{_norm_selection_fwd.1} parent=0 // pred_region
    _
  $region5: #{_norm_selection_fwd.1} parent=0 // pred_fallthru
    _
  // Predicated region
  $region6: #{_norm_selection_fwd.1} parent=0 // pred_check
    _
  $region7: #{_norm_selection_fwd.1} parent=0 // pred_check_branch
    %11 = sbr.rel (0) target = $region9
  $region8: #{_norm_selection_fwd.1} parent=0 // pred_region
    _
  $region9: #{_norm_selection_fwd.1} parent=0 // pred_fallthru
    _
  // Predicated region
  $region10: #{_norm_selection_fwd.1} parent=0 // pred_check
    _
  $region11: #{_norm_selection_fwd.1} parent=0 // pred_check_branch
    %13 = sbr.rel (0) target = $region13
  $region12: #{_norm_selection_fwd.1} parent=0 // pred_region
    _
  $region13: #{_norm_selection_fwd.1} parent=0 // pred_fallthru
    _
  %v14 = vld [vmem:[%s0] sm:$0xff]
  %v15 = vld [vmem:[%s0 + $0x8] sm:$0xff]
  %v16 = vld [vmem:[%s0 + $0x10] sm:$0xff]
  %v17 = vld [vmem:[%s0 + $0x18] sm:$0xff]
  %v18 = vld [vmem:[%s0 + $0x20] sm:$0xff]
  %v19 = vld [vmem:[%s0 + $0x28] sm:$0xff]
  %v20 = vld [vmem:[%s0 + $0x30] sm:$0xff]
  %v21 = vld [vmem:[%s0 + $0x38] sm:$0xff]
  %v30 = vcombine.high %v14, %v14
  %v31 = vcombine.high %v15, %v15
  %v32 = vcombine.high %v16, %v16
  %v33 = vcombine.high %v17, %v17
  %v34 = vcombine.high %v18, %v18
  %v35 = vcombine.high %v19, %v19
  %v36 = vcombine.high %v20, %v20
  %v37 = vcombine.high %v21, %v21
  %vm46 = vcmask 1043456
  %v47 = vsel %vm46, %v14, 0.0
  %v48 = vsel %vm46, %v30, 0.0
  %v49 = vadd.f32 %v47, %v48
  %v50 = vsel %vm46, %v15, 0.0
  %v51 = vadd.f32 %v49, %v50
  %v52 = vsel %vm46, %v31, 0.0
  %v53 = vadd.f32 %v51, %v52
  %54 = vadd.xlane.f32.xlu0 %v53
  %v55 = vpop.xlane.xlu0 %54
  %v56 = vsel %vm46, %v16, 0.0
  %v57 = vsel %vm46, %v32, 0.0
  %v58 = vadd.f32 %v56, %v57
  %v59 = vsel %vm46, %v17, 0.0
  %v60 = vadd.f32 %v58, %v59
  %v61 = vsel %vm46, %v33, 0.0
  %v62 = vadd.f32 %v60, %v61
  %63 = vadd.xlane.f32.xlu0 %v62
  %v64 = vpop.xlane.xlu0 %63
  %v65 = vsel %vm46, %v18, 0.0
  %v66 = vsel %vm46, %v34, 0.0
  %v67 = vadd.f32 %v65, %v66
  %v68 = vsel %vm46, %v19, 0.0
  %v69 = vadd.f32 %v67, %v68
  %v70 = vsel %vm46, %v35, 0.0
  %v71 = vadd.f32 %v69, %v70
  %72 = vadd.xlane.f32.xlu0 %v71
  %v73 = vpop.xlane.xlu0 %72
  %v74 = vsel %vm46, %v20, 0.0
  %v75 = vsel %vm46, %v36, 0.0
  %v76 = vadd.f32 %v74, %v75
  %v77 = vsel %vm46, %v21, 0.0
  %v78 = vadd.f32 %v76, %v77
  %v79 = vsel %vm46, %v37, 0.0
  %v80 = vadd.f32 %v78, %v79
  %81 = vadd.xlane.f32.xlu0 %v80
  %v82 = vpop.xlane.xlu0 %81
  %v83 = vmul.f32 %v14, %v14
  %v84 = vmul.f32 %v15, %v15
  %v85 = vmul.f32 %v16, %v16
  %v86 = vmul.f32 %v17, %v17
  %v87 = vmul.f32 %v18, %v18
  %v88 = vmul.f32 %v19, %v19
  %v89 = vmul.f32 %v20, %v20
  %v90 = vmul.f32 %v21, %v21
  %v99 = vcombine.high %v83, %v83
  %v100 = vcombine.high %v84, %v84
  %v101 = vcombine.high %v85, %v85
  %v102 = vcombine.high %v86, %v86
  %v103 = vcombine.high %v87, %v87
  %v104 = vcombine.high %v88, %v88
  %v105 = vcombine.high %v89, %v89
  %v106 = vcombine.high %v90, %v90
  %v115 = vsel %vm46, %v83, 0.0
  %v116 = vsel %vm46, %v99, 0.0
  %v117 = vadd.f32 %v115, %v116
  %v118 = vsel %vm46, %v84, 0.0
  %v119 = vadd.f32 %v117, %v118
  %v120 = vsel %vm46, %v100, 0.0
  %v121 = vadd.f32 %v119, %v120
  %122 = vadd.xlane.f32.xlu0 %v121
  %v123 = vpop.xlane.xlu0 %122
  %v124 = vsel %vm46, %v85, 0.0
  %v125 = vsel %vm46, %v101, 0.0
  %v126 = vadd.f32 %v124, %v125
  %v127 = vsel %vm46, %v86, 0.0
  %v128 = vadd.f32 %v126, %v127
  %v129 = vsel %vm46, %v102, 0.0
  %v130 = vadd.f32 %v128, %v129
  %131 = vadd.xlane.f32.xlu0 %v130
  %v132 = vpop.xlane.xlu0 %131
  %v133 = vsel %vm46, %v87, 0.0
  %v134 = vsel %vm46, %v103, 0.0
  %v135 = vadd.f32 %v133, %v134
  %v136 = vsel %vm46, %v88, 0.0
  %v137 = vadd.f32 %v135, %v136
  %v138 = vsel %vm46, %v104, 0.0
  %v139 = vadd.f32 %v137, %v138
  %140 = vadd.xlane.f32.xlu0 %v139
  %v141 = vpop.xlane.xlu0 %140
  %v142 = vsel %vm46, %v89, 0.0
  %v143 = vsel %vm46, %v105, 0.0
  %v144 = vadd.f32 %v142, %v143
  %v145 = vsel %vm46, %v90, 0.0
  %v146 = vadd.f32 %v144, %v145
  %v147 = vsel %vm46, %v106, 0.0
  %v148 = vadd.f32 %v146, %v147
  %149 = vadd.xlane.f32.xlu0 %v148
  %v150 = vpop.xlane.xlu0 %149
  %v151 = vmul.f32 %v55, 0.001953125
  %v152 = vmul.f32 %v64, 0.001953125
  %v153 = vmul.f32 %v73, 0.001953125
  %v154 = vmul.f32 %v82, 0.001953125
  %v155 = vmul.f32 %v123, 0.001953125
  %v156 = vmul.f32 %v132, 0.001953125
  %v157 = vmul.f32 %v141, 0.001953125
  %v158 = vmul.f32 %v150, 0.001953125
  %v159 = vmul.f32 %v151, %v151
  %v160 = vmul.f32 %v152, %v152
  %v161 = vmul.f32 %v153, %v153
  %v162 = vmul.f32 %v154, %v154
  %v163 = vsub.f32 %v155, %v159
  %v164 = vsub.f32 %v156, %v160
  %v165 = vsub.f32 %v157, %v161
  %v166 = vsub.f32 %v158, %v162
  %v167 = vmax.f32 %v163, 0.0
  %v168 = vmax.f32 %v164, 0.0
  %v169 = vmax.f32 %v165, 0.0
  %v170 = vmax.f32 %v166, 0.0
  %v171 = vadd.f32 %v167, 1e-05
  %v172 = vadd.f32 %v168, 1e-05
  %v173 = vadd.f32 %v169, 1e-05
  %v174 = vadd.f32 %v170, 1e-05
  %v175 = vrsqrt.pop %v171
  %v176 = vrsqrt.pop %v172
  %v177 = vrsqrt.pop %v173
  %v178 = vrsqrt.pop %v174
  %v179 = vld [vmem:[%s1] sm:$0xff]
  %v180 = vld [vmem:[%s1 + $0x8] sm:$0xff]
  %v183 = vcombine.high %v179, %v179
  %v184 = vcombine.high %v180, %v180
  %v187 = vmul.f32 %v175, %v179
  %v188 = vmul.f32 %v175, %v183
  %v189 = vmul.f32 %v175, %v180
  %v190 = vmul.f32 %v175, %v184
  %v191 = vmul.f32 %v176, %v179
  %v192 = vmul.f32 %v176, %v183
  %v193 = vmul.f32 %v176, %v180
  %v194 = vmul.f32 %v176, %v184
  %v195 = vmul.f32 %v177, %v179
  %v196 = vmul.f32 %v177, %v183
  %v197 = vmul.f32 %v177, %v180
  %v198 = vmul.f32 %v177, %v184
  %v199 = vmul.f32 %v178, %v179
  %v200 = vmul.f32 %v178, %v183
  %v201 = vmul.f32 %v178, %v180
  %v202 = vmul.f32 %v178, %v184
  %v203 = vld [vmem:[%s2] sm:$0xff]
  %v204 = vld [vmem:[%s2 + $0x8] sm:$0xff]
  %v205 = vmul.f32 %v151, %v187
  %v206 = vmul.f32 %v151, %v188
  %v207 = vmul.f32 %v151, %v189
  %v208 = vmul.f32 %v151, %v190
  %v209 = vmul.f32 %v152, %v191
  %v210 = vmul.f32 %v152, %v192
  %v211 = vmul.f32 %v152, %v193
  %v212 = vmul.f32 %v152, %v194
  %v213 = vmul.f32 %v153, %v195
  %v214 = vmul.f32 %v153, %v196
  %v215 = vmul.f32 %v153, %v197
  %v216 = vmul.f32 %v153, %v198
  %v217 = vmul.f32 %v154, %v199
  %v218 = vmul.f32 %v154, %v200
  %v219 = vmul.f32 %v154, %v201
  %v220 = vmul.f32 %v154, %v202
  %v237 = vcombine.low %v205, %v206
  %v238 = vcombine.low %v207, %v208
  %v239 = vcombine.low %v209, %v210
  %v240 = vcombine.low %v211, %v212
  %v241 = vcombine.low %v213, %v214
  %v242 = vcombine.low %v215, %v216
  %v243 = vcombine.low %v217, %v218
  %v244 = vcombine.low %v219, %v220
  %v253 = vsub.f32 %v203, %v237
  %v254 = vsub.f32 %v204, %v238
  %v255 = vsub.f32 %v203, %v239
  %v256 = vsub.f32 %v204, %v240
  %v257 = vsub.f32 %v203, %v241
  %v258 = vsub.f32 %v204, %v242
  %v259 = vsub.f32 %v203, %v243
  %v260 = vsub.f32 %v204, %v244
  %v277 = vcombine.low %v187, %v188
  %v278 = vcombine.low %v189, %v190
  %v279 = vcombine.low %v191, %v192
  %v280 = vcombine.low %v193, %v194
  %v281 = vcombine.low %v195, %v196
  %v282 = vcombine.low %v197, %v198
  %v283 = vcombine.low %v199, %v200
  %v284 = vcombine.low %v201, %v202
  %v293 = vmul.f32 %v14, %v277
  %v294 = vmul.f32 %v15, %v278
  %v295 = vmul.f32 %v16, %v279
  %v296 = vmul.f32 %v17, %v280
  %v297 = vmul.f32 %v18, %v281
  %v298 = vmul.f32 %v19, %v282
  %v299 = vmul.f32 %v20, %v283
  %v300 = vmul.f32 %v21, %v284
  %v301 = vadd.f32 %v293, %v253
  %v302 = vadd.f32 %v294, %v254
  %v303 = vadd.f32 %v295, %v255
  %v304 = vadd.f32 %v296, %v256
  %v305 = vadd.f32 %v297, %v257
  %v306 = vadd.f32 %v298, %v258
  %v307 = vadd.f32 %v299, %v259
  %v308 = vadd.f32 %v300, %v260
  %309 = vst [vmem:[%s3] sm:$0xff] %v301
  %310 = vst [vmem:[%s3 + $0x8] sm:$0xff] %v302
  %311 = vst [vmem:[%s3 + $0x10] sm:$0xff] %v303
  %312 = vst [vmem:[%s3 + $0x18] sm:$0xff] %v304
  %313 = vst [vmem:[%s3 + $0x20] sm:$0xff] %v305
  %314 = vst [vmem:[%s3 + $0x28] sm:$0xff] %v306
  %315 = vst [vmem:[%s3 + $0x30] sm:$0xff] %v307
  %316 = vst [vmem:[%s3 + $0x38] sm:$0xff] %v308
  // Predicated region
  $region14: #{_norm_selection_fwd.1} parent=0 // pred_check
    _
  $region15: #{_norm_selection_fwd.1} parent=0 // pred_check_branch
    %318 = sbr.rel (0) target = $region17
  $region16: #{_norm_selection_fwd.1} parent=0 // pred_region
    _
  $region17: #{_norm_selection_fwd.1} parent=0 // pred_fallthru
    _
  // Predicated region
  $region18: #{_norm_selection_fwd.1} parent=0 // pred_check
    _
  $region19: #{_norm_selection_fwd.1} parent=0 // pred_check_branch
    %320 = sbr.rel (0) target = $region21
  $region20: #{_norm_selection_fwd.1} parent=0 // pred_region
    _
  $region21: #{_norm_selection_fwd.1} parent=0 // pred_fallthru
    _

</llo_original>
